<compile_context>
chip_gen: v5e
topology: v5e:2x2
jax: 0.10.0
libtpu: 0.0.40
codegen_flags: <defaults>
</compile_context>

<pallas_src>
import functools

import jax
import jax.numpy as jnp
from jax import lax
from jax.experimental import pallas as pl
from jax.experimental.pallas import tpu as pltpu

ALPHA = 1.0
GAMMA = 2.0


def _focal_loss_kernel(logits_ref, targets_ref, out_ref, *,
                       alpha, gamma, n_total, tile_n):
    i = pl.program_id(0)

    x = logits_ref[...].astype(jnp.float32)        # (tile_n, C)
    t = targets_ref[...]                           # (tile_n, 1) int32

    # Numerically stable log-softmax pieces; the target gather is fused so we
    # never materialize a full (tile_n, C) log-prob temporary.
    m = jnp.max(x, axis=-1, keepdims=True)
    z = x - m
    lse = jnp.log(jnp.sum(jnp.exp(z), axis=-1, keepdims=True))

    col = lax.broadcasted_iota(jnp.int32, z.shape, 1)
    onehot = (col == t).astype(jnp.float32)        # no dynamic gather on TPU
    zt = jnp.sum(z * onehot, axis=-1, keepdims=True)   # z at target class
    logpt = zt - lse                               # (tile_n, 1), <= 0
    ce = -logpt                                    # per-sample CE
    pt = jnp.exp(logpt)

    # Clamp rounding noise (pt can exceed 1 by an ulp) and avoid float pow
    # (exp/log on the EUP) when gamma is an integer.
    one_minus_pt = jnp.maximum(1.0 - pt, 0.0)
    g = float(gamma)
    if g.is_integer():
        w = lax.integer_pow(one_minus_pt, int(g))  # plain VPU multiplies
    else:
        w = one_minus_pt ** g
    focal = w * ce
    if float(alpha) != 1.0:
        focal = focal * jnp.float32(alpha)

    # Mask rows past the true N (remainder tile of the cdiv grid); padded /
    # out-of-bounds rows may hold garbage but jnp.where is a select, so any
    # NaN there never propagates.
    row = i * tile_n + lax.broadcasted_iota(jnp.int32, (tile_n, 1), 0)
    out_ref[...] = jnp.where(row < n_total, focal, 0.0)


def focal_loss(logits, targets, *, alpha=ALPHA, gamma=GAMMA,
               reduction="mean", tile_n=1024):
    """logits: (N, C) float32/bf16; targets: (N,) int. Focal loss (mean/sum/none)."""
    n, c = logits.shape

    # Largest useful row tile: cap at N rounded up to a sublane multiple of 8.
    tile_n = max(8, min(int(tile_n), ((n + 7) // 8) * 8))
    tile_n = ((tile_n + 7) // 8) * 8
    num_tiles = pl.cdiv(n, tile_n)
    n_pad = num_tiles * tile_n

    targets2d = targets.reshape(n, 1).astype(jnp.int32)
    # TODO(synk): targets still travel as a 1-lane-wide VMEM tile per step;
    # with large tile_n the cost is negligible (HBM DMA only moves real bytes).

    kernel = functools.partial(
        _focal_loss_kernel, alpha=float(alpha), gamma=float(gamma),
        n_total=n, tile_n=tile_n)

    per_row = pl.pallas_call(
        kernel,
        out_shape=jax.ShapeDtypeStruct((n_pad, 1), jnp.float32),
        grid_spec=pltpu.PrefetchScalarGridSpec(
            num_scalar_prefetch=0,
            grid=(num_tiles,),
            in_specs=[
                pl.BlockSpec((tile_n, c), lambda i: (i, 0)),
                pl.BlockSpec((tile_n, 1), lambda i: (i, 0)),
            ],
            out_specs=pl.BlockSpec((tile_n, 1), lambda i: (i, 0)),
        ),
        compiler_params=pltpu.CompilerParams(
            dimension_semantics=("parallel",),       # both TCs on v7x
            vmem_limit_bytes=32 * 1024 * 1024),      # safe on v5e/v6e/v7x
    )(logits, targets2d)

    per_row = per_row[:n, 0]
    if reduction == "mean":
        return jnp.sum(per_row) / jnp.float32(n)
    elif reduction == "sum":
        return jnp.sum(per_row)
    return per_row


def _focal_loss_ref(logits, targets, alpha=ALPHA, gamma=GAMMA):
    logp = jax.nn.log_softmax(logits.astype(jnp.float32), axis=-1)
    ce = -jnp.take_along_axis(logp, targets[:, None].astype(jnp.int32),
                              axis=-1)[:, 0]
    pt = jnp.exp(-ce)
    return jnp.mean(alpha * (1.0 - pt) ** gamma * ce)


if __name__ == "__main__":
    key = jax.random.PRNGKey(0)
    k1, k2 = jax.random.split(key)
    N, C = 64, 10
    logits = jax.random.normal(k1, (N, C), dtype=jnp.float32)
    targets = jax.random.randint(k2, (N,), 0, C, dtype=jnp.int32)

    out = jax.block_until_ready(focal_loss(logits, targets))
    ref = _focal_loss_ref(logits, targets)
    assert jnp.allclose(out, ref, atol=1e-5, rtol=1e-5), (out, ref)

    # Non-multiple-of-tile N exercises the cdiv grid + remainder-row masking.
    k3, k4 = jax.random.split(k2)
    N2 = 100
    logits2 = jax.random.normal(k3, (N2, C), dtype=jnp.float32)
    targets2 = jax.random.randint(k4, (N2,), 0, C, dtype=jnp.int32)
    out2 = jax.block_until_ready(focal_loss(logits2, targets2))
    ref2 = _focal_loss_ref(logits2, targets2)
    assert jnp.allclose(out2, ref2, atol=1e-5, rtol=1e-5), (out2, ref2)

    print("KERNEL_OK")
</pallas_src>

<mosaic_0001>
module attributes {stable_mosaic.version = 11 : i64} {
  func.func @_focal_loss_kernel(%arg0: i32, %arg1: memref<64x10xf32, #tpu.memory_space<vmem>>, %arg2: memref<64x1xi32, #tpu.memory_space<vmem>>, %arg3: memref<64x1xf32, #tpu.memory_space<vmem>>) attributes {dimension_semantics = [#tpu.dimension_semantics<parallel>], iteration_bounds = array<i64: 1>, scalar_prefetch = 0 : i64, scratch_operands = 0 : i64, tpu.core_type = #tpu.core_type<tc>, window_params = [{transform_indices = @transform_0, window_bounds = array<i64: 64, 10>}, {transform_indices = @transform_1, window_bounds = array<i64: 64, 1>}, {transform_indices = @transform_2, window_bounds = array<i64: 64, 1>}]} {
    %c0 = arith.constant 0 : index
    %c0_0 = arith.constant 0 : index
    %0 = vector.load %arg1[%c0, %c0_0] : memref<64x10xf32, #tpu.memory_space<vmem>>, vector<64x10xf32>
    %c0_1 = arith.constant 0 : index
    %c0_2 = arith.constant 0 : index
    %1 = vector.load %arg2[%c0_1, %c0_2] : memref<64x1xi32, #tpu.memory_space<vmem>>, vector<64x1xi32>
    %cst = arith.constant dense<0xFF800000> : vector<64xf32>
    %2 = vector.multi_reduction <maximumf>, %0, %cst [1] : vector<64x10xf32> to vector<64xf32>
    %3 = vector.shape_cast %2 : vector<64xf32> to vector<64x1xf32>
    %4 = vector.broadcast %3 : vector<64x1xf32> to vector<64x10xf32>
    %5 = arith.subf %0, %4 : vector<64x10xf32>
    %6 = math.exp %5 : vector<64x10xf32>
    %cst_3 = arith.constant dense<0.000000e+00> : vector<64xf32>
    %7 = vector.multi_reduction <add>, %6, %cst_3 [1] : vector<64x10xf32> to vector<64xf32>
    %8 = vector.shape_cast %7 : vector<64xf32> to vector<64x1xf32>
    %9 = math.log %8 : vector<64x1xf32>
    %10 = tpu.iota {dimensions = array<i32: 1>} : vector<64x10xi32>
    %11 = vector.broadcast %1 : vector<64x1xi32> to vector<64x10xi32>
    %12 = arith.cmpi eq, %10, %11 : vector<64x10xi32>
    %13 = arith.extui %12 : vector<64x10xi1> to vector<64x10xi32>
    %14 = arith.sitofp %13 : vector<64x10xi32> to vector<64x10xf32>
    %15 = arith.mulf %5, %14 : vector<64x10xf32>
    %cst_4 = arith.constant dense<0.000000e+00> : vector<64xf32>
    %16 = vector.multi_reduction <add>, %15, %cst_4 [1] : vector<64x10xf32> to vector<64xf32>
    %17 = vector.shape_cast %16 : vector<64xf32> to vector<64x1xf32>
    %18 = arith.subf %17, %9 : vector<64x1xf32>
    %cst_5 = arith.constant 0.000000e+00 : f32
    %19 = vector.broadcast %cst_5 : f32 to vector<64x1xf32>
    %20 = arith.subf %19, %18 : vector<64x1xf32>
    %21 = math.exp %18 : vector<64x1xf32>
    %cst_6 = arith.constant 1.000000e+00 : f32
    %22 = vector.broadcast %cst_6 : f32 to vector<64x1xf32>
    %23 = arith.subf %22, %21 : vector<64x1xf32>
    %cst_7 = arith.constant 0.000000e+00 : f32
    %24 = vector.broadcast %cst_7 : f32 to vector<64x1xf32>
    %25 = arith.maximumf %23, %24 : vector<64x1xf32>
    %26 = arith.mulf %25, %25 : vector<64x1xf32>
    %27 = arith.mulf %26, %20 : vector<64x1xf32>
    %c64_i32 = arith.constant 64 : i32
    %28 = arith.muli %arg0, %c64_i32 : i32
    %29 = tpu.iota {dimensions = array<i32: 0>} : vector<64x1xi32>
    %30 = vector.broadcast %28 : i32 to vector<64x1xi32>
    %31 = arith.addi %30, %29 : vector<64x1xi32>
    %c64_i32_8 = arith.constant 64 : i32
    %32 = vector.broadcast %c64_i32_8 : i32 to vector<64x1xi32>
    %33 = arith.cmpi slt, %31, %32 : vector<64x1xi32>
    %cst_9 = arith.constant 0.000000e+00 : f32
    %34 = vector.broadcast %cst_9 : f32 to vector<64x1xf32>
    %35 = arith.select %33, %27, %34 : vector<64x1xi1>, vector<64x1xf32>
    %c0_10 = arith.constant 0 : index
    %c0_11 = arith.constant 0 : index
    %36 = vector.load %arg3[%c0_10, %c0_11] : memref<64x1xf32, #tpu.memory_space<vmem>>, vector<64x1xf32>
    tpu.vector_store %arg3[%c0_10, %c0_11], %35 {strides = array<i32>} : memref<64x1xf32, #tpu.memory_space<vmem>>, vector<64x1xf32>,
    return
  }
  func.func @transform_0(%arg0: i32) -> (i32, i32) {
    %c0_i32 = arith.constant 0 : i32
    %c0_i32_0 = arith.constant 0 : i32
    return %arg0, %c0_i32 : i32, i32
  }
  func.func @transform_1(%arg0: i32) -> (i32, i32) {
    %c0_i32 = arith.constant 0 : i32
    %c0_i32_0 = arith.constant 0 : i32
    return %arg0, %c0_i32 : i32, i32
  }
  func.func @transform_2(%arg0: i32) -> (i32, i32) {
    %c0_i32 = arith.constant 0 : i32
    %c0_i32_0 = arith.constant 0 : i32
    return %arg0, %c0_i32 : i32, i32
  }
}

</mosaic_0001>

<llo_original>
// kernel: tpu_custom_call.1
$region0: #{tpu_custom_call.1}
  #allocation0 [shape = 'u32[]', space=smem, size = 0x4, offset = 0x4, fixed_abs, tag = 'smem constant byte address 0x4 - core index']
  #allocation1 [shape = 'u32[72,128]{1,0:T(1,128)}', space=vmem, size = 0x9000, scoped, tag = 'internal scratch']
  %s0 = inlined_call_operand.vmem [shape: f32[64,10], index: 0, kind: input, shape index: {}]
  %s1 = inlined_call_operand.vmem [shape: s32[64,1], index: 1, kind: input, shape index: {}]
  %s2 = inlined_call_operand.vmem [shape: f32[64,1], index: 2, kind: output, shape index: {}]
  %s3 = sld [smem:[#allocation0]]
  $region18: #{tpu_custom_call.1} parent=0
    _
  %s5 = ssub.s32 1, %s3
  %s6 = scalar_select 0, %s5, %s3
  // Predicated region
  $region2: #{tpu_custom_call.1} parent=0 // pred_check
    _
  $region3: #{tpu_custom_call.1} parent=0 // pred_check_branch
    %8 = sbr.rel (0) target = $region5
  $region4: #{tpu_custom_call.1} parent=0 // pred_region
    _
  $region5: #{tpu_custom_call.1} parent=0 // pred_fallthru
    _
  // Predicated region
  $region6: #{tpu_custom_call.1} parent=0 // pred_check
    _
  $region7: #{tpu_custom_call.1} parent=0 // pred_check_branch
    %10 = sbr.rel (0) target = $region9
  $region8: #{tpu_custom_call.1} parent=0 // pred_region
    _
  $region9: #{tpu_custom_call.1} parent=0 // pred_fallthru
    _
  %v11 = vld [vmem:[%s0] sm:$0xff]
  %v12 = vld [vmem:[%s0 + $0x8] sm:$0xff]
  %v13 = vld [vmem:[%s0 + $0x10] sm:$0xff]
  %v14 = vld [vmem:[%s0 + $0x18] sm:$0xff]
  %v15 = vld [vmem:[%s0 + $0x20] sm:$0xff]
  %v16 = vld [vmem:[%s0 + $0x28] sm:$0xff]
  %v17 = vld [vmem:[%s0 + $0x30] sm:$0xff]
  %v18 = vld [vmem:[%s0 + $0x38] sm:$0xff]
  %v19 = vld [vmem:[%s1] sm:$0xff]
  %v20 = vld [vmem:[%s1 + $0x8] sm:$0xff]
  %v21 = vld [vmem:[%s1 + $0x10] sm:$0xff]
  %v22 = vld [vmem:[%s1 + $0x18] sm:$0xff]
  %v23 = vld [vmem:[%s1 + $0x20] sm:$0xff]
  %v24 = vld [vmem:[%s1 + $0x28] sm:$0xff]
  %v25 = vld [vmem:[%s1 + $0x30] sm:$0xff]
  %v26 = vld [vmem:[%s1 + $0x38] sm:$0xff]
  %vm27 = vcmask 80896
  %v28 = vsel %vm27, %v11, -inf
  %29 = vmax.xlane.f32.xlu0 %v28
  %v30 = vpop.xlane.xlu0 %29
  %v31 = vsel %vm27, %v12, -inf
  %32 = vmax.xlane.f32.xlu0 %v31
  %v33 = vpop.xlane.xlu0 %32
  %v34 = vsel %vm27, %v13, -inf
  %35 = vmax.xlane.f32.xlu0 %v34
  %v36 = vpop.xlane.xlu0 %35
  %v37 = vsel %vm27, %v14, -inf
  %38 = vmax.xlane.f32.xlu0 %v37
  %v39 = vpop.xlane.xlu0 %38
  %v40 = vsel %vm27, %v15, -inf
  %41 = vmax.xlane.f32.xlu0 %v40
  %v42 = vpop.xlane.xlu0 %41
  %v43 = vsel %vm27, %v16, -inf
  %44 = vmax.xlane.f32.xlu0 %v43
  %v45 = vpop.xlane.xlu0 %44
  %v46 = vsel %vm27, %v17, -inf
  %47 = vmax.xlane.f32.xlu0 %v46
  %v48 = vpop.xlane.xlu0 %47
  %v49 = vsel %vm27, %v18, -inf
  %50 = vmax.xlane.f32.xlu0 %v49
  %v51 = vpop.xlane.xlu0 %50
  %v52 = vsub.f32 %v11, %v30
  %v53 = vsub.f32 %v12, %v33
  %v54 = vsub.f32 %v13, %v36
  %v55 = vsub.f32 %v14, %v39
  %v56 = vsub.f32 %v15, %v42
  %v57 = vsub.f32 %v16, %v45
  %v58 = vsub.f32 %v17, %v48
  %v59 = vsub.f32 %v18, %v51
  %v60 = vmul.f32 %v52, 1.442695
  %v61 = vpow.pop %v60
  %v62 = vmul.f32 %v53, 1.442695
  %v63 = vpow.pop %v62
  %v64 = vmul.f32 %v54, 1.442695
  %v65 = vpow.pop %v64
  %v66 = vmul.f32 %v55, 1.442695
  %v67 = vpow.pop %v66
  %v68 = vmul.f32 %v56, 1.442695
  %v69 = vpow.pop %v68
  %v70 = vmul.f32 %v57, 1.442695
  %v71 = vpow.pop %v70
  %v72 = vmul.f32 %v58, 1.442695
  %v73 = vpow.pop %v72
  %v74 = vmul.f32 %v59, 1.442695
  %v75 = vpow.pop %v74
  %v76 = vsel %vm27, %v61, 0.0
  %77 = vadd.xlane.f32.xlu0 %v76
  %v78 = vpop.xlane.xlu0 %77
  %v79 = vsel %vm27, %v63, 0.0
  %80 = vadd.xlane.f32.xlu0 %v79
  %v81 = vpop.xlane.xlu0 %80
  %v82 = vsel %vm27, %v65, 0.0
  %83 = vadd.xlane.f32.xlu0 %v82
  %v84 = vpop.xlane.xlu0 %83
  %v85 = vsel %vm27, %v67, 0.0
  %86 = vadd.xlane.f32.xlu0 %v85
  %v87 = vpop.xlane.xlu0 %86
  %v88 = vsel %vm27, %v69, 0.0
  %89 = vadd.xlane.f32.xlu0 %v88
  %v90 = vpop.xlane.xlu0 %89
  %v91 = vsel %vm27, %v71, 0.0
  %92 = vadd.xlane.f32.xlu0 %v91
  %v93 = vpop.xlane.xlu0 %92
  %v94 = vsel %vm27, %v73, 0.0
  %95 = vadd.xlane.f32.xlu0 %v94
  %v96 = vpop.xlane.xlu0 %95
  %v97 = vsel %vm27, %v75, 0.0
  %98 = vadd.xlane.f32.xlu0 %v97
  %v99 = vpop.xlane.xlu0 %98
  %v100 = vlog2.pop %v78
  %v101 = vmul.f32 %v100, 0.6931472
  %v102 = vlog2.pop %v81
  %v103 = vmul.f32 %v102, 0.6931472
  %v104 = vlog2.pop %v84
  %v105 = vmul.f32 %v104, 0.6931472
  %v106 = vlog2.pop %v87
  %v107 = vmul.f32 %v106, 0.6931472
  %v108 = vlog2.pop %v90
  %v109 = vmul.f32 %v108, 0.6931472
  %v110 = vlog2.pop %v93
  %v111 = vmul.f32 %v110, 0.6931472
  %v112 = vlog2.pop %v96
  %v113 = vmul.f32 %v112, 0.6931472
  %v114 = vlog2.pop %v99
  %v115 = vmul.f32 %v114, 0.6931472
  %v116 = vlaneseq
  %v117 = vand.u32 %v116, 127
  %118 = vset.pattern.permute.xlu0 0
  %119 = vperm.xlu0 %118, %v19
  %v120 = vpop.permute.xlu0 %119
  %121 = vset.pattern.permute.xlu0 0
  %122 = vperm.xlu0 %121, %v20
  %v123 = vpop.permute.xlu0 %122
  %124 = vset.pattern.permute.xlu0 0
  %125 = vperm.xlu0 %124, %v21
  %v126 = vpop.permute.xlu0 %125
  %127 = vset.pattern.permute.xlu0 0
  %128 = vperm.xlu0 %127, %v22
  %v129 = vpop.permute.xlu0 %128
  %130 = vset.pattern.permute.xlu0 0
  %131 = vperm.xlu0 %130, %v23
  %v132 = vpop.permute.xlu0 %131
  %133 = vset.pattern.permute.xlu0 0
  %134 = vperm.xlu0 %133, %v24
  %v135 = vpop.permute.xlu0 %134
  %136 = vset.pattern.permute.xlu0 0
  %137 = vperm.xlu0 %136, %v25
  %v138 = vpop.permute.xlu0 %137
  %139 = vset.pattern.permute.xlu0 0
  %140 = vperm.xlu0 %139, %v26
  %v141 = vpop.permute.xlu0 %140
  %vm142 = vcmp.eq.s32.totalorder %v117, %v120
  %vm143 = vcmp.eq.s32.totalorder %v117, %v123
  %vm144 = vcmp.eq.s32.totalorder %v117, %v126
  %vm145 = vcmp.eq.s32.totalorder %v117, %v129
  %vm146 = vcmp.eq.s32.totalorder %v117, %v132
  %vm147 = vcmp.eq.s32.totalorder %v117, %v135
  %vm148 = vcmp.eq.s32.totalorder %v117, %v138
  %vm149 = vcmp.eq.s32.totalorder %v117, %v141
  %v150 = vsel %vm142, 1, 0
  %v151 = vsel %vm143, 1, 0
  %v152 = vsel %vm144, 1, 0
  %v153 = vsel %vm145, 1, 0
  %v154 = vsel %vm146, 1, 0
  %v155 = vsel %vm147, 1, 0
  %v156 = vsel %vm148, 1, 0
  %v157 = vsel %vm149, 1, 0
  %v158 = vcvt.s32.f32 %v150
  %v159 = vcvt.s32.f32 %v151
  %v160 = vcvt.s32.f32 %v152
  %v161 = vcvt.s32.f32 %v153
  %v162 = vcvt.s32.f32 %v154
  %v163 = vcvt.s32.f32 %v155
  %v164 = vcvt.s32.f32 %v156
  %v165 = vcvt.s32.f32 %v157
  %v166 = vmul.f32 %v52, %v158
  %v167 = vmul.f32 %v53, %v159
  %v168 = vmul.f32 %v54, %v160
  %v169 = vmul.f32 %v55, %v161
  %v170 = vmul.f32 %v56, %v162
  %v171 = vmul.f32 %v57, %v163
  %v172 = vmul.f32 %v58, %v164
  %v173 = vmul.f32 %v59, %v165
  %v174 = vsel %vm27, %v166, 0.0
  %175 = vadd.xlane.f32.xlu0 %v174
  %v176 = vpop.xlane.xlu0 %175
  %v177 = vsel %vm27, %v167, 0.0
  %178 = vadd.xlane.f32.xlu0 %v177
  %v179 = vpop.xlane.xlu0 %178
  %v180 = vsel %vm27, %v168, 0.0
  %181 = vadd.xlane.f32.xlu0 %v180
  %v182 = vpop.xlane.xlu0 %181
  %v183 = vsel %vm27, %v169, 0.0
  %184 = vadd.xlane.f32.xlu0 %v183
  %v185 = vpop.xlane.xlu0 %184
  %v186 = vsel %vm27, %v170, 0.0
  %187 = vadd.xlane.f32.xlu0 %v186
  %v188 = vpop.xlane.xlu0 %187
  %v189 = vsel %vm27, %v171, 0.0
  %190 = vadd.xlane.f32.xlu0 %v189
  %v191 = vpop.xlane.xlu0 %190
  %v192 = vsel %vm27, %v172, 0.0
  %193 = vadd.xlane.f32.xlu0 %v192
  %v194 = vpop.xlane.xlu0 %193
  %v195 = vsel %vm27, %v173, 0.0
  %196 = vadd.xlane.f32.xlu0 %v195
  %v197 = vpop.xlane.xlu0 %196
  %v198 = vsub.f32 %v176, %v101
  %v199 = vsub.f32 %v179, %v103
  %v200 = vsub.f32 %v182, %v105
  %v201 = vsub.f32 %v185, %v107
  %v202 = vsub.f32 %v188, %v109
  %v203 = vsub.f32 %v191, %v111
  %v204 = vsub.f32 %v194, %v113
  %v205 = vsub.f32 %v197, %v115
  %v206 = vsub.f32 0.0, %v198
  %v207 = vsub.f32 0.0, %v199
  %v208 = vsub.f32 0.0, %v200
  %v209 = vsub.f32 0.0, %v201
  %v210 = vsub.f32 0.0, %v202
  %v211 = vsub.f32 0.0, %v203
  %v212 = vsub.f32 0.0, %v204
  %v213 = vsub.f32 0.0, %v205
  %v214 = vmul.f32 %v198, 1.442695
  %v215 = vpow.pop %v214
  %v216 = vmul.f32 %v199, 1.442695
  %v217 = vpow.pop %v216
  %v218 = vmul.f32 %v200, 1.442695
  %v219 = vpow.pop %v218
  %v220 = vmul.f32 %v201, 1.442695
  %v221 = vpow.pop %v220
  %v222 = vmul.f32 %v202, 1.442695
  %v223 = vpow.pop %v222
  %v224 = vmul.f32 %v203, 1.442695
  %v225 = vpow.pop %v224
  %v226 = vmul.f32 %v204, 1.442695
  %v227 = vpow.pop %v226
  %v228 = vmul.f32 %v205, 1.442695
  %v229 = vpow.pop %v228
  %v230 = vsub.f32 1.0, %v215
  %v231 = vsub.f32 1.0, %v217
  %v232 = vsub.f32 1.0, %v219
  %v233 = vsub.f32 1.0, %v221
  %v234 = vsub.f32 1.0, %v223
  %v235 = vsub.f32 1.0, %v225
  %v236 = vsub.f32 1.0, %v227
  %v237 = vsub.f32 1.0, %v229
  %v238 = vmax.f32 %v230, 0.0
  %v239 = vmax.f32 %v231, 0.0
  %v240 = vmax.f32 %v232, 0.0
  %v241 = vmax.f32 %v233, 0.0
  %v242 = vmax.f32 %v234, 0.0
  %v243 = vmax.f32 %v235, 0.0
  %v244 = vmax.f32 %v236, 0.0
  %v245 = vmax.f32 %v237, 0.0
  %v246 = vmul.f32 %v238, %v238
  %v247 = vmul.f32 %v239, %v239
  %v248 = vmul.f32 %v240, %v240
  %v249 = vmul.f32 %v241, %v241
  %v250 = vmul.f32 %v242, %v242
  %v251 = vmul.f32 %v243, %v243
  %v252 = vmul.f32 %v244, %v244
  %v253 = vmul.f32 %v245, %v245
  %v254 = vmul.f32 %v246, %v206
  %v255 = vmul.f32 %v247, %v207
  %v256 = vmul.f32 %v248, %v208
  %v257 = vmul.f32 %v249, %v209
  %v258 = vmul.f32 %v250, %v210
  %v259 = vmul.f32 %v251, %v211
  %v260 = vmul.f32 %v252, %v212
  %v261 = vmul.f32 %v253, %v213
  %s262 = smul.u32 0, 64
  %v263 = vlaneseq
  %v264 = vshrl.u32 %v263, 7
  %v265 = vadd.s32 %v264, 8
  %v266 = vadd.s32 %v264, 16
  %v267 = vadd.s32 %v264, 24
  %v268 = vadd.s32 %v264, 32
  %v269 = vadd.s32 %v264, 40
  %v270 = vadd.s32 %v264, 48
  %v271 = vadd.s32 %v264, 56
  %v272 = vstv %s262
  %v273 = vadd.s32 %v272, %v264
  %v274 = vadd.s32 %v272, %v265
  %v275 = vadd.s32 %v272, %v266
  %v276 = vadd.s32 %v272, %v267
  %v277 = vadd.s32 %v272, %v268
  %v278 = vadd.s32 %v272, %v269
  %v279 = vadd.s32 %v272, %v270
  %v280 = vadd.s32 %v272, %v271
  %vm281 = vcmp.lt.s32.totalorder %v273, 64
  %vm282 = vcmp.lt.s32.totalorder %v274, 64
  %vm283 = vcmp.lt.s32.totalorder %v275, 64
  %vm284 = vcmp.lt.s32.totalorder %v276, 64
  %vm285 = vcmp.lt.s32.totalorder %v277, 64
  %vm286 = vcmp.lt.s32.totalorder %v278, 64
  %vm287 = vcmp.lt.s32.totalorder %v279, 64
  %vm288 = vcmp.lt.s32.totalorder %v280, 64
  %v289 = vsel %vm281, %v254, 0.0
  %v290 = vsel %vm282, %v255, 0.0
  %v291 = vsel %vm283, %v256, 0.0
  %v292 = vsel %vm284, %v257, 0.0
  %v293 = vsel %vm285, %v258, 0.0
  %v294 = vsel %vm286, %v259, 0.0
  %v295 = vsel %vm287, %v260, 0.0
  %v296 = vsel %vm288, %v261, 0.0
  %vm297 = vcmask 7168
  %298 = vst.msk [vmem:[%s2] sm:$0xff] %vm297, %v289
  %299 = vst.msk [vmem:[%s2 + $0x8] sm:$0xff] %vm297, %v290
  %300 = vst.msk [vmem:[%s2 + $0x10] sm:$0xff] %vm297, %v291
  %301 = vst.msk [vmem:[%s2 + $0x18] sm:$0xff] %vm297, %v292
  %302 = vst.msk [vmem:[%s2 + $0x20] sm:$0xff] %vm297, %v293
  %303 = vst.msk [vmem:[%s2 + $0x28] sm:$0xff] %vm297, %v294
  %304 = vst.msk [vmem:[%s2 + $0x30] sm:$0xff] %vm297, %v295
  %305 = vst.msk [vmem:[%s2 + $0x38] sm:$0xff] %vm297, %v296
  // Predicated region
  $region10: #{tpu_custom_call.1} parent=0 // pred_check
    _
  $region11: #{tpu_custom_call.1} parent=0 // pred_check_branch
    %307 = sbr.rel (0) target = $region13
  $region12: #{tpu_custom_call.1} parent=0 // pred_region
    _
  $region13: #{tpu_custom_call.1} parent=0 // pred_fallthru
    _
  // Predicated region
  $region14: #{tpu_custom_call.1} parent=0 // pred_check
    _
  $region15: #{tpu_custom_call.1} parent=0 // pred_check_branch
    %309 = sbr.rel (0) target = $region17
  $region16: #{tpu_custom_call.1} parent=0 // pred_region
    _
  $region17: #{tpu_custom_call.1} parent=0 // pred_fallthru
    _

</llo_original>
